<compile_context>
chip_gen: v7x
topology: tpu7x:2x2x1
jax: 0.10.0
libtpu: 0.0.40
codegen_flags: <defaults>
</compile_context>

<pallas_src>
import jax
import jax.numpy as jnp
from jax.experimental import pallas as pl
from jax.experimental.pallas import tpu as pltpu

LANES = 512  # lane width of each packed row (multiple of 128)


def _round_up(a, b):
    return ((a + b - 1) // b) * b


def lr_kernel(params_ref, x_ref, o_ref):
    # params_ref: SMEM (3,) f32          -> [w0, w1, b]
    # x_ref:      VMEM (2, TILE_R, LANES) f32  (feature-major dense planes)
    # o_ref:      VMEM (TILE_R, LANES)    out dtype (lane/sublane-dense slab)
    w0 = params_ref[0]
    w1 = params_ref[1]
    b = params_ref[2]

    x0 = x_ref[0]                              # (TILE_R, LANES), full-density
    x1 = x_ref[1]                              # (TILE_R, LANES)
    z = x0 * w0 + x1 * w1 + b                  # VPU multiply-adds (no MXU for K=2)
    o_ref[...] = jax.nn.sigmoid(z).astype(o_ref.dtype)   # EUP sigmoid


def lr_forward(x, weight, bias, *, max_tile_rows=256):
    """x: (N, 2); weight: (1, 2) (PyTorch layout); bias: (1,). Returns (N, 1)."""
    N, F = x.shape
    assert F == 2, "LR module is Linear(2, 1)"
    assert max_tile_rows % 8 == 0, "tile rows must be a multiple of 8 (sublanes)"

    out_dtype = x.dtype

    # Tile sizing: as big as useful, but clamp for small N so padding stays tiny.
    rows_needed = int(pl.cdiv(N, LANES))
    tile_rows = min(max_tile_rows, _round_up(rows_needed, 8))
    n_blocks = int(pl.cdiv(rows_needed, tile_rows))
    rows = n_blocks * tile_rows
    n_pad = rows * LANES

    # Feature-major, padded repack as ONE fused pad+transpose XLA pass, then a
    # free contiguous reshape into (2, rows, LANES) dense planes.
    # TODO(synk): accept x already feature-major/blocked from the producer to
    # remove this extra HBM pass (the remaining ~2x traffic overhead).
    x_fm = jnp.zeros((F, n_pad), jnp.float32).at[:, :N].set(x.T.astype(jnp.float32))
    x_fm = x_fm.reshape(F, rows, LANES)

    # 3 scalars -> SMEM.
    params = jnp.concatenate(
        [weight.reshape(-1).astype(jnp.float32),
         bias.reshape(-1).astype(jnp.float32)])          # (3,) = [w0, w1, b]

    out = pl.pallas_call(
        lr_kernel,
        out_shape=jax.ShapeDtypeStruct((rows, LANES), out_dtype),
        grid=(n_blocks,),
        in_specs=[
            pl.BlockSpec(memory_space=pltpu.MemorySpace.SMEM),       # params
            pl.BlockSpec((F, tile_rows, LANES), lambda i: (0, i, 0)),  # x planes
        ],
        out_specs=pl.BlockSpec((tile_rows, LANES), lambda i: (i, 0)),
        compiler_params=pltpu.CompilerParams(
            dimension_semantics=("parallel",),
            vmem_limit_bytes=32 * 1024 * 1024,
        ),
    )(params, x_fm)

    # Padded tail lanes hold sigmoid(b); slice them off (free contiguous reshape).
    return out.reshape(n_pad)[:N].reshape(N, 1)


if __name__ == "__main__":
    key = jax.random.PRNGKey(0)
    k_x, k_w, k_b = jax.random.split(key, 3)

    N, F_IN, F_OUT = 1000, 2, 1   # N not a multiple of 128 -> exercises padding

    # Deterministic "Linear(2, 1)" params, PyTorch-style uniform(-1/sqrt(F), 1/sqrt(F))
    bound = 1.0 / jnp.sqrt(jnp.float32(F_IN))
    weight = jax.random.uniform(k_w, (F_OUT, F_IN), jnp.float32, -bound, bound)
    bias = jax.random.uniform(k_b, (F_OUT,), jnp.float32, -bound, bound)

    x = jax.random.normal(k_x, (N, F_IN), jnp.float32)

    y = lr_forward(x, weight, bias)
    y = jax.block_until_ready(y)

    # sanity check vs plain-JAX reference
    y_ref = jax.nn.sigmoid(x @ weight.T + bias)
    assert y.shape == (N, F_OUT)
    assert jnp.allclose(y, y_ref, atol=1e-5, rtol=1e-5)

    print("KERNEL_OK")
</pallas_src>

<mosaic_0001>
module attributes {stable_mosaic.version = 11 : i64} {
  func.func @lr_kernel(%arg0: i32, %arg1: memref<3xf32, #tpu.memory_space<smem>>, %arg2: memref<2x8x512xf32, #tpu.memory_space<vmem>>, %arg3: memref<8x512xf32, #tpu.memory_space<vmem>>) attributes {dimension_semantics = [#tpu.dimension_semantics<parallel>], iteration_bounds = array<i64: 1>, scalar_prefetch = 0 : i64, scratch_operands = 0 : i64, tpu.core_type = #tpu.core_type<tc>, window_params = [{transform_indices = @transform_0, window_bounds = array<i64: 3>}, {transform_indices = @transform_1, window_bounds = array<i64: 2, 8, 512>}, {transform_indices = @transform_2, window_bounds = array<i64: 8, 512>}]} {
    %c0 = arith.constant 0 : index
    %0 = memref.load %arg1[%c0] : memref<3xf32, #tpu.memory_space<smem>>
    %c1 = arith.constant 1 : index
    %1 = memref.load %arg1[%c1] : memref<3xf32, #tpu.memory_space<smem>>
    %c2 = arith.constant 2 : index
    %2 = memref.load %arg1[%c2] : memref<3xf32, #tpu.memory_space<smem>>
    %c0_0 = arith.constant 0 : index
    %c0_1 = arith.constant 0 : index
    %c0_2 = arith.constant 0 : index
    %3 = vector.load %arg2[%c0_0, %c0_1, %c0_2] : memref<2x8x512xf32, #tpu.memory_space<vmem>>, vector<1x8x512xf32>
    %4 = vector.shape_cast %3 : vector<1x8x512xf32> to vector<8x512xf32>
    %c1_3 = arith.constant 1 : index
    %c0_4 = arith.constant 0 : index
    %c0_5 = arith.constant 0 : index
    %5 = vector.load %arg2[%c1_3, %c0_4, %c0_5] : memref<2x8x512xf32, #tpu.memory_space<vmem>>, vector<1x8x512xf32>
    %6 = vector.shape_cast %5 : vector<1x8x512xf32> to vector<8x512xf32>
    %7 = vector.broadcast %0 : f32 to vector<8x512xf32>
    %8 = arith.mulf %4, %7 : vector<8x512xf32>
    %9 = vector.broadcast %1 : f32 to vector<8x512xf32>
    %10 = arith.mulf %6, %9 : vector<8x512xf32>
    %11 = arith.addf %8, %10 : vector<8x512xf32>
    %12 = vector.broadcast %2 : f32 to vector<8x512xf32>
    %13 = arith.addf %11, %12 : vector<8x512xf32>
    %14 = arith.negf %13 : vector<8x512xf32>
    %15 = math.exp %14 : vector<8x512xf32>
    %cst = arith.constant 1.000000e+00 : f32
    %16 = vector.broadcast %cst : f32 to vector<8x512xf32>
    %17 = arith.addf %16, %15 : vector<8x512xf32>
    %18 = arith.divf %16, %17 : vector<8x512xf32>
    %c0_6 = arith.constant 0 : index
    %c0_7 = arith.constant 0 : index
    %19 = vector.load %arg3[%c0_6, %c0_7] : memref<8x512xf32, #tpu.memory_space<vmem>>, vector<8x512xf32>
    tpu.vector_store %arg3[%c0_6, %c0_7], %18 {strides = array<i32>} : memref<8x512xf32, #tpu.memory_space<vmem>>, vector<8x512xf32>,
    return
  }
  func.func @transform_0(%arg0: i32) -> i32 {
    %c0_i32 = arith.constant 0 : i32
    %c0_i32_0 = arith.constant 0 : i32
    return %c0_i32 : i32
  }
  func.func @transform_1(%arg0: i32) -> (i32, i32, i32) {
    %c0_i32 = arith.constant 0 : i32
    %c0_i32_0 = arith.constant 0 : i32
    %c0_i32_1 = arith.constant 0 : i32
    return %c0_i32, %arg0, %c0_i32_0 : i32, i32, i32
  }
  func.func @transform_2(%arg0: i32) -> (i32, i32) {
    %c0_i32 = arith.constant 0 : i32
    %c0_i32_0 = arith.constant 0 : i32
    return %arg0, %c0_i32 : i32, i32
  }
}

</mosaic_0001>

<llo_original>
// kernel: tpu_custom_call.1
$region0: #{tpu_custom_call.1}
  #allocation0 [shape = 'u32[]', space=smem, size = 0x4, offset = 0x4, fixed_abs, tag = 'smem constant byte address 0x4 - core index']
  #allocation1 [shape = 'u32[144,128]{1,0:T(1,128)}', space=vmem, size = 0x12000, scoped, tag = 'internal scratch']
  %s0 = inlined_call_operand.hbm [shape: f32[3], index: 0, kind: input, shape index: {}]
  %s1 = inlined_call_operand.hbm [shape: f32[2,8,512], index: 1, kind: input, shape index: {}]
  %s2 = inlined_call_operand.hbm [shape: f32[8,512], index: 2, kind: output, shape index: {}]
  %s3 = sld [smem:[#allocation0]]
  $region26: #{tpu_custom_call.1} parent=0
    _
  %s5 = ssub.s32 1, %s3
  %s6 = scalar_select 0, %s5, %s3
  $region1: #{tpu_custom_call.1} parent=0
    #allocation2 [shape = 'u8[512]{0}', space=smem, size = 0x200, scoped, tag = 'input window, operand 0, single buffered']
    #allocation3 [shape = 's32[1]{0}', space=sflag, size = 0x4, scoped, tag = 'scoped memory for tpu_custom_call.1']
    #allocation4 [shape = 's32[1]{0}', space=sflag, size = 0x4, scoped, tag = 'scoped memory for tpu_custom_call.1']
    #allocation5 [shape = 's32[1]{0}', space=sflag, size = 0x4, scoped, tag = 'scoped memory for tpu_custom_call.1']
    #allocation6 [shape = 'u8[32768]{0}', space=vmem, size = 0x8000, scoped, tag = 'input window, operand 1, single buffered']
    #allocation7 [shape = 'u8[16384]{0}', space=vmem, size = 0x4000, scoped, tag = 'output window, operand 0, single buffered']
    %7 = vsyncpa [#allocation5], 0
    %8 = vsyncpa [#allocation3], 0
    %9 = vsyncpa [#allocation4], 0
    // Predicated region
    $region2: #{tpu_custom_call.1} parent=1 // pred_check
      _
    $region3: #{tpu_custom_call.1} parent=1 // pred_check_branch
      %11 = sbr.rel (0) target = $region5
    $region4: #{tpu_custom_call.1} parent=1 // pred_region
      %s13 = ssub.s32 16, 16
      %14 = vsyncadd [#allocation5], %s13
      %17 = dma.hbm_to_smem %s0, 16, [#allocation2], [#allocation5]
    $region5: #{tpu_custom_call.1} parent=1 // pred_fallthru
      _
    // Predicated region
    $region6: #{tpu_custom_call.1} parent=1 // pred_check
      _
    $region7: #{tpu_custom_call.1} parent=1 // pred_check_branch
      %19 = sbr.rel (0) target = $region9
    $region8: #{tpu_custom_call.1} parent=1 // pred_region
      %s21 = ssub.s32 1024, 1024
      %22 = vsyncadd [#allocation3], %s21
      %s23 = sshll.u32 [#allocation6], 4
      %s24 = int_to_ptr.vmem [resolvable:$true] %s23
      %29 = dma.hbm_to_vmem [thread:$0]  %s1, 1024, %s24, [#allocation3], 512, 512, 32
    $region9: #{tpu_custom_call.1} parent=1 // pred_fallthru
      _
    // Predicated region
    $region10: #{tpu_custom_call.1} parent=1 // pred_check
      _
    $region11: #{tpu_custom_call.1} parent=1 // pred_check_branch
      %31 = sbr.rel (0) target = $region13
    $region12: #{tpu_custom_call.1} parent=1 // pred_region
      %32 = dma.done [#allocation5], 16
    $region13: #{tpu_custom_call.1} parent=1 // pred_fallthru
      _
    // Predicated region
    $region14: #{tpu_custom_call.1} parent=1 // pred_check
      _
    $region15: #{tpu_custom_call.1} parent=1 // pred_check_branch
      %34 = sbr.rel (0) target = $region17
    $region16: #{tpu_custom_call.1} parent=1 // pred_region
      %35 = dma.done [#allocation3], 1024
    $region17: #{tpu_custom_call.1} parent=1 // pred_fallthru
      _
    %36 = sfence
    %s37 = sld [smem:[#allocation2]]
    %s38 = sld [smem:[#allocation2 + $0x1]]
    %s39 = sld [smem:[#allocation2 + $0x2]]
    %v40 = vld [vmem:[#allocation6] sm:$0xff]
    %v41 = vld [vmem:[#allocation6 + $0x8] sm:$0xff]
    %v42 = vld [vmem:[#allocation6 + $0x10] sm:$0xff]
    %v43 = vld [vmem:[#allocation6 + $0x18] sm:$0xff]
    %s44 = scalar_lea.vmem [#allocation6], 32
    %v45 = vld [vmem:[%s44] sm:$0xff]
    %v46 = vld [vmem:[%s44 + $0x8] sm:$0xff]
    %v47 = vld [vmem:[%s44 + $0x10] sm:$0xff]
    %v48 = vld [vmem:[%s44 + $0x18] sm:$0xff]
    %v49 = vstv %s37
    %v50 = vmul.f32 %v40, %v49
    %v51 = vmul.f32 %v41, %v49
    %v52 = vmul.f32 %v42, %v49
    %v53 = vmul.f32 %v43, %v49
    %v54 = vstv %s38
    %v55 = vmul.f32 %v45, %v54
    %v56 = vmul.f32 %v46, %v54
    %v57 = vmul.f32 %v47, %v54
    %v58 = vmul.f32 %v48, %v54
    %v59 = vadd.f32 %v50, %v55
    %v60 = vadd.f32 %v51, %v56
    %v61 = vadd.f32 %v52, %v57
    %v62 = vadd.f32 %v53, %v58
    %v63 = vstv %s39
    %v64 = vadd.f32 %v59, %v63
    %v65 = vadd.f32 %v60, %v63
    %v66 = vadd.f32 %v61, %v63
    %v67 = vadd.f32 %v62, %v63
    %v68 = vxor.u32 %v64, 2147483648
    %v69 = vxor.u32 %v65, 2147483648
    %v70 = vxor.u32 %v66, 2147483648
    %v71 = vxor.u32 %v67, 2147483648
    %v72 = vmul.f32 %v68, 1.442695
    %v73 = vpow.pop %v72
    %v74 = vmul.f32 %v69, 1.442695
    %v75 = vpow.pop %v74
    %v76 = vmul.f32 %v70, 1.442695
    %v77 = vpow.pop %v76
    %v78 = vmul.f32 %v71, 1.442695
    %v79 = vpow.pop %v78
    %v80 = vadd.f32 %v73, 1.0
    %v81 = vadd.f32 %v75, 1.0
    %v82 = vadd.f32 %v77, 1.0
    %v83 = vadd.f32 %v79, 1.0
    %v84 = vrcp.pop %v80
    %v85 = vmul.f32 1.0, %v84
    %v86 = vrcp.pop %v81
    %v87 = vmul.f32 1.0, %v86
    %v88 = vrcp.pop %v82
    %v89 = vmul.f32 1.0, %v88
    %v90 = vrcp.pop %v83
    %v91 = vmul.f32 1.0, %v90
    %92 = vst [vmem:[#allocation7] sm:$0xff] %v85
    %93 = vst [vmem:[#allocation7 + $0x8] sm:$0xff] %v87
    %94 = vst [vmem:[#allocation7 + $0x10] sm:$0xff] %v89
    %95 = vst [vmem:[#allocation7 + $0x18] sm:$0xff] %v91
    // Predicated region
    $region18: #{tpu_custom_call.1} parent=1 // pred_check
      _
    $region19: #{tpu_custom_call.1} parent=1 // pred_check_branch
      %97 = sbr.rel (0) target = $region21
    $region20: #{tpu_custom_call.1} parent=1 // pred_region
      %s99 = ssub.s32 512, 512
      %100 = vsyncadd [#allocation4], %s99
      %s102 = sshll.u32 [#allocation7], 4
      %s103 = int_to_ptr.vmem [resolvable:$true] %s102
      %105 = dma.vmem_to_hbm [thread:$0]  %s103, 512, %s2, [#allocation4]
    $region21: #{tpu_custom_call.1} parent=1 // pred_fallthru
      _
    // Predicated region
    $region22: #{tpu_custom_call.1} parent=1 // pred_check
      _
    $region23: #{tpu_custom_call.1} parent=1 // pred_check_branch
      %107 = sbr.rel (0) target = $region25
    $region24: #{tpu_custom_call.1} parent=1 // pred_region
      %108 = dma.done [#allocation4], 512
    $region25: #{tpu_custom_call.1} parent=1 // pred_fallthru
      _
    %109 = vsyncpa [#allocation3], 1
    %110 = vsyncpa [#allocation4], 1
    %111 = vsyncpa [#allocation5], 1

</llo_original>
